<compile_context>
chip_gen: v7x
topology: tpu7x:2x2x1
jax: 0.10.0
libtpu: 0.0.40
codegen_flags: <defaults>
</compile_context>

<pallas_src>
import functools

import jax
import jax.numpy as jnp
from jax.experimental import pallas as pl
from jax.experimental.pallas import tpu as pltpu

NEG_SLOPE = 0.01                 # nn.LeakyReLU() default negative_slope
MAX_TILE_BYTES = 8 * 1024 * 1024  # per input buffer (2-deep buffering -> <=16 MiB live)


def fcn_ml_kernel(x_ref, wvg_ref, w1_ref, b1_ref, w2_ref, b2_ref, w3_ref, b3_ref,
                  out_ref, acc_ref, *, inv_n):
    # x_ref : (B, 8, TILE_N) tile of the (B, 8, H*W) input (channels on sublanes)
    # wvg   : (8, 1)  = vem_gamma2 * wv_norm
    # w1    : (8, 64)   b1: (1, 64)
    # w2    : (64, 64)  b2: (1, 64)
    # w3    : (64, 8)   b3: (1, 8)
    # out   : (1, 8)
    # acc   : (8, 1) f32 scratch — running per-channel sum of squares
    pid = pl.program_id(0)

    @pl.when(pid == 0)
    def _init():
        acc_ref[...] = jnp.zeros_like(acc_ref)

    # Hot path: accumulate raw sum(x*x) per channel for this tile.
    x = x_ref[...].astype(jnp.float32)                        # (B, 8, T)
    part = jnp.sum(x * x, axis=2, keepdims=True)              # (B, 8, 1)
    acc_ref[...] += jnp.sum(part, axis=0)                     # (8, 1)

    @pl.when(pid == pl.num_programs(0) - 1)
    def _finalize():
        msq = acc_ref[...] * inv_n                            # mean of squares, (8, 1)
        beta_col = jnp.sqrt(msq + wvg_ref[...])               # (8, 1)

        # Move the 8 per-channel values from sublanes to lanes (tiny, runs once):
        rows = jax.lax.broadcasted_iota(jnp.int32, (8, 8), 0)
        cols = jax.lax.broadcasted_iota(jnp.int32, (8, 8), 1)
        eye8 = (rows == cols).astype(jnp.float32)
        beta = jnp.sum(beta_col * eye8, axis=0, keepdims=True)  # (1, 8)

        h = jnp.dot(beta, w1_ref[...], preferred_element_type=jnp.float32) + b1_ref[...]
        h = jnp.where(h > 0, h, NEG_SLOPE * h)                # LeakyReLU
        h = jnp.dot(h, w2_ref[...], preferred_element_type=jnp.float32) + b2_ref[...]
        h = jnp.where(h > 0, h, NEG_SLOPE * h)                # LeakyReLU
        o = jnp.dot(h, w3_ref[...], preferred_element_type=jnp.float32) + b3_ref[...]
        out_ref[...] = o * o                                  # out ** 2


def _pick_tile_n(hw, max_tile_n):
    """Largest multiple of 128 that divides hw and is <= max_tile_n (else hw itself)."""
    if hw % 128 != 0:
        return hw
    t = min(hw, max(128, (max_tile_n // 128) * 128))
    t = (t // 128) * 128
    while t >= 128:
        if hw % t == 0:
            return t
        t -= 128
    return hw


def _const_spec(arr):
    zeros = (0,) * arr.ndim
    return pl.BlockSpec(arr.shape, lambda i, _z=zeros: _z)


def fcn_ml_forward(x, params, wv_norm, vem_gamma2):
    """x: (B, 8, H, W) NCHW.  Returns (8,) float32."""
    B, C, H, W = x.shape
    assert C == 8, "FCN_ML forward hard-codes 8 channels"
    w1, b1, w2, b2, w3, b3 = params

    HW = H * W
    x3 = x.reshape(B, C, HW)                       # free reshape, no HBM transpose

    max_tile_n = max(128, MAX_TILE_BYTES // max(1, B * C * x.dtype.itemsize))
    tile_n = _pick_tile_n(HW, max_tile_n)
    num_tiles = HW // tile_n
    inv_n = 1.0 / float(B * HW)

    wvg = (jnp.float32(vem_gamma2) * wv_norm.astype(jnp.float32)).reshape(C, 1)
    consts = (wvg,
              w1.astype(jnp.float32), b1.reshape(1, -1).astype(jnp.float32),
              w2.astype(jnp.float32), b2.reshape(1, -1).astype(jnp.float32),
              w3.astype(jnp.float32), b3.reshape(1, -1).astype(jnp.float32))

    kernel = functools.partial(fcn_ml_kernel, inv_n=inv_n)

    grid_spec = pltpu.PrefetchScalarGridSpec(
        num_scalar_prefetch=0,
        grid=(num_tiles,),
        in_specs=[pl.BlockSpec((B, C, tile_n), lambda i: (0, 0, i))]
                 + [_const_spec(a) for a in consts],
        out_specs=pl.BlockSpec((1, C), lambda i: (0, 0)),
        scratch_shapes=[pltpu.VMEM((C, 1), jnp.float32)],
    )

    out = pl.pallas_call(
        kernel,
        out_shape=jax.ShapeDtypeStruct((1, C), jnp.float32),
        grid_spec=grid_spec,
        compiler_params=pltpu.CompilerParams(
            dimension_semantics=("arbitrary",),
            vmem_limit_bytes=40 * 1024 * 1024,
        ),
    )(x3, *consts)
    return out.reshape(C)


def init_params(key, n_in=8, n_mid=64, n_out=8):
    """PyTorch-style Linear init U(-1/sqrt(fan_in), 1/sqrt(fan_in)).
    Weights stored as (in, out) so the kernel does row-vector matmuls."""
    def linear(k, fan_in, fan_out):
        kw, kb = jax.random.split(k)
        bound = 1.0 / jnp.sqrt(jnp.float32(fan_in))
        w = jax.random.uniform(kw, (fan_in, fan_out), jnp.float32, -bound, bound)
        b = jax.random.uniform(kb, (fan_out,), jnp.float32, -bound, bound)
        return w, b

    k1, k2, k3 = jax.random.split(key, 3)
    w1, b1 = linear(k1, n_in, n_mid)    # Linear(8, 64)
    w2, b2 = linear(k2, n_mid, n_mid)   # Linear(64, 64)  (depth=3 -> one hidden layer)
    w3, b3 = linear(k3, n_mid, n_out)   # Linear(64, 8)
    return (w1, b1, w2, b2, w3, b3)


def reference_forward(x, params, wv_norm, vem_gamma2):
    """Pure-JAX reference for sanity checking."""
    w1, b1, w2, b2, w3, b3 = params
    msq = jnp.mean(x.astype(jnp.float32) ** 2, axis=(0, 2, 3))        # (8,)
    beta = jnp.sqrt(msq + vem_gamma2 * wv_norm)
    h = beta @ w1 + b1
    h = jnp.where(h > 0, h, NEG_SLOPE * h)
    h = h @ w2 + b2
    h = jnp.where(h > 0, h, NEG_SLOPE * h)
    o = h @ w3 + b3
    return o ** 2


if __name__ == "__main__":
    key = jax.random.PRNGKey(0)
    kx, kp, kf = jax.random.split(key, 3)

    # Small but consistent shapes: batch=2, channels=8 (required by forward), 16x16 spatial.
    x = jax.random.normal(kx, (2, 8, 16, 16), jnp.float32)

    params = init_params(kp)

    # TODO(synk): wv_norm(filters) (wavelet filter norms) is defined elsewhere in the source
    # repo; use a deterministic positive stand-in vector of length 8 instead.
    wv_norm = jnp.abs(jax.random.normal(kf, (8,), jnp.float32)) + 0.1
    vem_gamma2 = 0.1

    out = fcn_ml_forward(x, params, wv_norm, vem_gamma2)
    out = jax.block_until_ready(out)

    ref = reference_forward(x, params, wv_norm, vem_gamma2)
    assert out.shape == (8,)
    assert jnp.allclose(out, ref, rtol=1e-5, atol=1e-5), (out, ref)

    print("KERNEL_OK")
</pallas_src>

<mosaic_0001>
module attributes {stable_mosaic.version = 11 : i64} {
  func.func @fcn_ml_kernel(%arg0: i32, %arg1: memref<2x8x256xf32, #tpu.memory_space<vmem>>, %arg2: memref<8x1xf32, #tpu.memory_space<vmem>>, %arg3: memref<8x64xf32, #tpu.memory_space<vmem>>, %arg4: memref<1x64xf32, #tpu.memory_space<vmem>>, %arg5: memref<64x64xf32, #tpu.memory_space<vmem>>, %arg6: memref<1x64xf32, #tpu.memory_space<vmem>>, %arg7: memref<64x8xf32, #tpu.memory_space<vmem>>, %arg8: memref<1x8xf32, #tpu.memory_space<vmem>>, %arg9: memref<1x8xf32, #tpu.memory_space<vmem>>, %arg10: memref<8x1xf32, #tpu.memory_space<vmem>>) attributes {dimension_semantics = [#tpu.dimension_semantics<arbitrary>], iteration_bounds = array<i64: 1>, scalar_prefetch = 0 : i64, scratch_operands = 1 : i64, tpu.core_type = #tpu.core_type<tc>, window_params = [{transform_indices = @transform_0, window_bounds = array<i64: 2, 8, 256>}, {pipeline_mode = #tpu.pipeline_mode<synchronous>, transform_indices = @transform_1, window_bounds = array<i64: 8, 1>}, {pipeline_mode = #tpu.pipeline_mode<synchronous>, transform_indices = @transform_2, window_bounds = array<i64: 8, 64>}, {pipeline_mode = #tpu.pipeline_mode<synchronous>, transform_indices = @transform_3, window_bounds = array<i64: 1, 64>}, {pipeline_mode = #tpu.pipeline_mode<synchronous>, transform_indices = @transform_4, window_bounds = array<i64: 64, 64>}, {pipeline_mode = #tpu.pipeline_mode<synchronous>, transform_indices = @transform_5, window_bounds = array<i64: 1, 64>}, {pipeline_mode = #tpu.pipeline_mode<synchronous>, transform_indices = @transform_6, window_bounds = array<i64: 64, 8>}, {pipeline_mode = #tpu.pipeline_mode<synchronous>, transform_indices = @transform_7, window_bounds = array<i64: 1, 8>}, {pipeline_mode = #tpu.pipeline_mode<synchronous>, transform_indices = @transform_8, window_bounds = array<i64: 1, 8>}]} {
    %c0_i32 = arith.constant 0 : i32
    %0 = arith.cmpi eq, %arg0, %c0_i32 : i32
    %1 = arith.extui %0 : i1 to i32
    %c0_i32_0 = arith.constant 0 : i32
    %2 = arith.cmpi ne, %1, %c0_i32_0 : i32
    scf.if %2 {
      %cst_10 = arith.constant 0.000000e+00 : f32
      %14 = vector.broadcast %cst_10 : f32 to vector<8x1xf32>
      %c0_11 = arith.constant 0 : index
      %c0_12 = arith.constant 0 : index
      %15 = vector.load %arg10[%c0_11, %c0_12] : memref<8x1xf32, #tpu.memory_space<vmem>>, vector<8x1xf32>
      tpu.vector_store %arg10[%c0_11, %c0_12], %14 {strides = array<i32>} : memref<8x1xf32, #tpu.memory_space<vmem>>, vector<8x1xf32>,
    } else {
    }
    %c0 = arith.constant 0 : index
    %c0_1 = arith.constant 0 : index
    %c0_2 = arith.constant 0 : index
    %3 = vector.load %arg1[%c0, %c0_1, %c0_2] : memref<2x8x256xf32, #tpu.memory_space<vmem>>, vector<2x8x256xf32>
    %4 = arith.mulf %3, %3 : vector<2x8x256xf32>
    %cst = arith.constant dense<0.000000e+00> : vector<2x8xf32>
    %5 = vector.multi_reduction <add>, %4, %cst [2] : vector<2x8x256xf32> to vector<2x8xf32>
    %6 = vector.shape_cast %5 : vector<2x8xf32> to vector<2x8x1xf32>
    %c0_3 = arith.constant 0 : index
    %c0_4 = arith.constant 0 : index
    %7 = vector.load %arg10[%c0_3, %c0_4] : memref<8x1xf32, #tpu.memory_space<vmem>>, vector<8x1xf32>
    %cst_5 = arith.constant dense<0.000000e+00> : vector<8x1xf32>
    %8 = vector.multi_reduction <add>, %6, %cst_5 [0] : vector<2x8x1xf32> to vector<8x1xf32>
    %9 = arith.addf %7, %8 : vector<8x1xf32>
    %c0_6 = arith.constant 0 : index
    %c0_7 = arith.constant 0 : index
    %10 = vector.load %arg10[%c0_6, %c0_7] : memref<8x1xf32, #tpu.memory_space<vmem>>, vector<8x1xf32>
    tpu.vector_store %arg10[%c0_6, %c0_7], %9 {strides = array<i32>} : memref<8x1xf32, #tpu.memory_space<vmem>>, vector<8x1xf32>,
    %c0_i32_8 = arith.constant 0 : i32
    %11 = arith.cmpi eq, %arg0, %c0_i32_8 : i32
    %12 = arith.extui %11 : i1 to i32
    %c0_i32_9 = arith.constant 0 : i32
    %13 = arith.cmpi ne, %12, %c0_i32_9 : i32
    scf.if %13 {
      %c0_10 = arith.constant 0 : index
      %c0_11 = arith.constant 0 : index
      %14 = vector.load %arg10[%c0_10, %c0_11] : memref<8x1xf32, #tpu.memory_space<vmem>>, vector<8x1xf32>
      %cst_12 = arith.constant 0.001953125 : f32
      %15 = vector.broadcast %cst_12 : f32 to vector<8x1xf32>
      %16 = arith.mulf %14, %15 : vector<8x1xf32>
      %c0_13 = arith.constant 0 : index
      %c0_14 = arith.constant 0 : index
      %17 = vector.load %arg2[%c0_13, %c0_14] : memref<8x1xf32, #tpu.memory_space<vmem>>, vector<8x1xf32>
      %18 = arith.addf %16, %17 : vector<8x1xf32>
      %19 = math.sqrt %18 : vector<8x1xf32>
      %20 = tpu.iota {dimensions = array<i32: 0>} : vector<8x8xi32>
      %21 = tpu.iota {dimensions = array<i32: 1>} : vector<8x8xi32>
      %22 = arith.cmpi eq, %20, %21 : vector<8x8xi32>
      %23 = arith.extui %22 : vector<8x8xi1> to vector<8x8xi32>
      %24 = arith.sitofp %23 : vector<8x8xi32> to vector<8x8xf32>
      %25 = vector.broadcast %19 : vector<8x1xf32> to vector<8x8xf32>
      %26 = arith.mulf %25, %24 : vector<8x8xf32>
      %cst_15 = arith.constant dense<0.000000e+00> : vector<8xf32>
      %27 = vector.multi_reduction <add>, %26, %cst_15 [0] : vector<8x8xf32> to vector<8xf32>
      %28 = vector.shape_cast %27 : vector<8xf32> to vector<1x8xf32>
      %c0_16 = arith.constant 0 : index
      %c0_17 = arith.constant 0 : index
      %29 = vector.load %arg3[%c0_16, %c0_17] : memref<8x64xf32, #tpu.memory_space<vmem>>, vector<8x64xf32>
      %cst_18 = arith.constant dense<0.000000e+00> : vector<1x64xf32>
      %30 = tpu.matmul %28, %29, %cst_18 {dimension_numbers = #tpu.dot_dimension_numbers<[1], [0], [0], [1], [0, 0, 1, 1], [], []>} : vector<1x8xf32>, vector<8x64xf32>, vector<1x64xf32> -> vector<1x64xf32>
      %c0_19 = arith.constant 0 : index
      %c0_20 = arith.constant 0 : index
      %31 = vector.load %arg4[%c0_19, %c0_20] : memref<1x64xf32, #tpu.memory_space<vmem>>, vector<1x64xf32>
      %32 = arith.addf %30, %31 : vector<1x64xf32>
      %cst_21 = arith.constant 0.000000e+00 : f32
      %33 = vector.broadcast %cst_21 : f32 to vector<1x64xf32>
      %34 = arith.cmpf ogt, %32, %33 : vector<1x64xf32>
      %cst_22 = arith.constant 0.00999999977 : f32
      %35 = vector.broadcast %cst_22 : f32 to vector<1x64xf32>
      %36 = arith.mulf %35, %32 : vector<1x64xf32>
      %37 = arith.select %34, %32, %36 : vector<1x64xi1>, vector<1x64xf32>
      %c0_23 = arith.constant 0 : index
      %c0_24 = arith.constant 0 : index
      %38 = vector.load %arg5[%c0_23, %c0_24] : memref<64x64xf32, #tpu.memory_space<vmem>>, vector<64x64xf32>
      %cst_25 = arith.constant dense<0.000000e+00> : vector<1x64xf32>
      %39 = tpu.matmul %37, %38, %cst_25 {dimension_numbers = #tpu.dot_dimension_numbers<[1], [0], [0], [1], [0, 0, 1, 1], [], []>} : vector<1x64xf32>, vector<64x64xf32>, vector<1x64xf32> -> vector<1x64xf32>
      %c0_26 = arith.constant 0 : index
      %c0_27 = arith.constant 0 : index
      %40 = vector.load %arg6[%c0_26, %c0_27] : memref<1x64xf32, #tpu.memory_space<vmem>>, vector<1x64xf32>
      %41 = arith.addf %39, %40 : vector<1x64xf32>
      %cst_28 = arith.constant 0.000000e+00 : f32
      %42 = vector.broadcast %cst_28 : f32 to vector<1x64xf32>
      %43 = arith.cmpf ogt, %41, %42 : vector<1x64xf32>
      %cst_29 = arith.constant 0.00999999977 : f32
      %44 = vector.broadcast %cst_29 : f32 to vector<1x64xf32>
      %45 = arith.mulf %44, %41 : vector<1x64xf32>
      %46 = arith.select %43, %41, %45 : vector<1x64xi1>, vector<1x64xf32>
      %c0_30 = arith.constant 0 : index
      %c0_31 = arith.constant 0 : index
      %47 = vector.load %arg7[%c0_30, %c0_31] : memref<64x8xf32, #tpu.memory_space<vmem>>, vector<64x8xf32>
      %cst_32 = arith.constant dense<0.000000e+00> : vector<1x8xf32>
      %48 = tpu.matmul %46, %47, %cst_32 {dimension_numbers = #tpu.dot_dimension_numbers<[1], [0], [0], [1], [0, 0, 1, 1], [], []>} : vector<1x64xf32>, vector<64x8xf32>, vector<1x8xf32> -> vector<1x8xf32>
      %c0_33 = arith.constant 0 : index
      %c0_34 = arith.constant 0 : index
      %49 = vector.load %arg8[%c0_33, %c0_34] : memref<1x8xf32, #tpu.memory_space<vmem>>, vector<1x8xf32>
      %50 = arith.addf %48, %49 : vector<1x8xf32>
      %51 = arith.mulf %50, %50 : vector<1x8xf32>
      %c0_35 = arith.constant 0 : index
      %c0_36 = arith.constant 0 : index
      %52 = vector.load %arg9[%c0_35, %c0_36] : memref<1x8xf32, #tpu.memory_space<vmem>>, vector<1x8xf32>
      tpu.vector_store %arg9[%c0_35, %c0_36], %51 {strides = array<i32>} : memref<1x8xf32, #tpu.memory_space<vmem>>, vector<1x8xf32>,
    } else {
    }
    return
  }
  func.func @transform_0(%arg0: i32) -> (i32, i32, i32) {
    %c0_i32 = arith.constant 0 : i32
    %c0_i32_0 = arith.constant 0 : i32
    %c0_i32_1 = arith.constant 0 : i32
    return %c0_i32, %c0_i32_0, %arg0 : i32, i32, i32
  }
  func.func @transform_1(%arg0: i32) -> (i32, i32) {
    %c0_i32 = arith.constant 0 : i32
    %c0_i32_0 = arith.constant 0 : i32
    %c0_i32_1 = arith.constant 0 : i32
    return %c0_i32, %c0_i32_0 : i32, i32
  }
  func.func @transform_2(%arg0: i32) -> (i32, i32) {
    %c0_i32 = arith.constant 0 : i32
    %c0_i32_0 = arith.constant 0 : i32
    %c0_i32_1 = arith.constant 0 : i32
    return %c0_i32, %c0_i32_0 : i32, i32
  }
  func.func @transform_3(%arg0: i32) -> (i32, i32) {
    %c0_i32 = arith.constant 0 : i32
    %c0_i32_0 = arith.constant 0 : i32
    %c0_i32_1 = arith.constant 0 : i32
    return %c0_i32, %c0_i32_0 : i32, i32
  }
  func.func @transform_4(%arg0: i32) -> (i32, i32) {
    %c0_i32 = arith.constant 0 : i32
    %c0_i32_0 = arith.constant 0 : i32
    %c0_i32_1 = arith.constant 0 : i32
    return %c0_i32, %c0_i32_0 : i32, i32
  }
  func.func @transform_5(%arg0: i32) -> (i32, i32) {
    %c0_i32 = arith.constant 0 : i32
    %c0_i32_0 = arith.constant 0 : i32
    %c0_i32_1 = arith.constant 0 : i32
    return %c0_i32, %c0_i32_0 : i32, i32
  }
  func.func @transform_6(%arg0: i32) -> (i32, i32) {
    %c0_i32 = arith.constant 0 : i32
    %c0_i32_0 = arith.constant 0 : i32
    %c0_i32_1 = arith.constant 0 : i32
    return %c0_i32, %c0_i32_0 : i32, i32
  }
  func.func @transform_7(%arg0: i32) -> (i32, i32) {
    %c0_i32 = arith.constant 0 : i32
    %c0_i32_0 = arith.constant 0 : i32
    %c0_i32_1 = arith.constant 0 : i32
    return %c0_i32, %c0_i32_0 : i32, i32
  }
  func.func @transform_8(%arg0: i32) -> (i32, i32) {
    %c0_i32 = arith.constant 0 : i32
    %c0_i32_0 = arith.constant 0 : i32
    %c0_i32_1 = arith.constant 0 : i32
    return %c0_i32, %c0_i32_0 : i32, i32
  }
}

</mosaic_0001>

<llo_original>
// kernel: tpu_custom_call.1
$region0: #{tpu_custom_call.1}
  #allocation0 [shape = 'u32[]', space=smem, size = 0x4, offset = 0x4, fixed_abs, tag = 'smem constant byte address 0x4 - core index']
  #allocation1 [shape = 'u32[144,128]{1,0:T(1,128)}', space=vmem, size = 0x12000, scoped, tag = 'internal scratch']
  #allocation2 [shape = 'f32[8,1]{1,0:T(8,128)}', space=vmem, size = 0x1000, scoped, tag = 'scratch operand']
  %s0 = inlined_call_operand.vmem [shape: f32[2,8,256], index: 0, kind: input, shape index: {}]
  %s1 = inlined_call_operand.vmem [shape: f32[8,1], index: 1, kind: input, shape index: {}]
  %s2 = inlined_call_operand.hbm [shape: f32[8,64], index: 2, kind: input, shape index: {}]
  %s3 = inlined_call_operand.hbm [shape: f32[1,64], index: 3, kind: input, shape index: {}]
  %s4 = inlined_call_operand.vmem [shape: f32[64,64], index: 4, kind: input, shape index: {}]
  %s5 = inlined_call_operand.vmem [shape: f32[1,64], index: 5, kind: input, shape index: {}]
  %s6 = inlined_call_operand.vmem [shape: f32[64,8], index: 6, kind: input, shape index: {}]
  %s7 = inlined_call_operand.vmem [shape: f32[1,8], index: 7, kind: input, shape index: {}]
  %s8 = inlined_call_operand.hbm [shape: f32[1,8], index: 8, kind: output, shape index: {}]
  %s9 = sld [smem:[#allocation0]]
  $region58: #{tpu_custom_call.1} parent=0
    _
  %s11 = ssub.s32 1, %s9
  %s12 = scalar_select 0, %s11, %s9
  $region1: #{tpu_custom_call.1} parent=0
    #allocation3 [shape = 'u8[4096]{0}', space=vmem, size = 0x1000, scoped, tag = 'input window, operand 2, single buffered']
    #allocation4 [shape = 's32[1]{0}', space=sflag, size = 0x4, scoped, tag = 'scoped memory for tpu_custom_call.1']
    #allocation5 [shape = 's32[1]{0}', space=sflag, size = 0x4, scoped, tag = 'scoped memory for tpu_custom_call.1']
    #allocation6 [shape = 'u8[512]{0}', space=vmem, size = 0x400, scoped, tag = 'input window, operand 3, single buffered']
    #allocation7 [shape = 's32[1]{0}', space=sflag, size = 0x4, scoped, tag = 'scoped memory for tpu_custom_call.1']
    #allocation8 [shape = 'u8[512]{0}', space=vmem, size = 0x400, scoped, tag = 'output window, operand 0, single buffered']
    %13 = vsyncpa [#allocation4], 0
    %14 = vsyncpa [#allocation7], 0
    %15 = vsyncpa [#allocation5], 0
    // Predicated region
    $region2: #{tpu_custom_call.1} parent=1 // pred_check
      _
    $region3: #{tpu_custom_call.1} parent=1 // pred_check_branch
      %17 = sbr.rel (0) target = $region5
    $region4: #{tpu_custom_call.1} parent=1 // pred_region
      _
    $region5: #{tpu_custom_call.1} parent=1 // pred_fallthru
      _
    // Predicated region
    $region6: #{tpu_custom_call.1} parent=1 // pred_check
      _
    $region7: #{tpu_custom_call.1} parent=1 // pred_check_branch
      %19 = sbr.rel (0) target = $region9
    $region8: #{tpu_custom_call.1} parent=1 // pred_region
      _
    $region9: #{tpu_custom_call.1} parent=1 // pred_fallthru
      _
    // Predicated region
    $region10: #{tpu_custom_call.1} parent=1 // pred_check
      _
    $region11: #{tpu_custom_call.1} parent=1 // pred_check_branch
      %21 = sbr.rel (0) target = $region13
    $region12: #{tpu_custom_call.1} parent=1 // pred_region
      %s23 = ssub.s32 128, 128
      %24 = vsyncadd [#allocation4], %s23
      %s26 = sshll.u32 [#allocation3], 4
      %s27 = int_to_ptr.vmem [resolvable:$true] %s26
      %29 = dma.hbm_to_vmem [thread:$0]  %s2, 128, %s27, [#allocation4]
    $region13: #{tpu_custom_call.1} parent=1 // pred_fallthru
      _
    // Predicated region
    $region14: #{tpu_custom_call.1} parent=1 // pred_check
      _
    $region15: #{tpu_custom_call.1} parent=1 // pred_check_branch
      %31 = sbr.rel (0) target = $region17
    $region16: #{tpu_custom_call.1} parent=1 // pred_region
      %s33 = ssub.s32 16, 16
      %34 = vsyncadd [#allocation7], %s33
      %s36 = sshll.u32 [#allocation6], 4
      %s37 = int_to_ptr.vmem [resolvable:$true] %s36
      %39 = dma.hbm_to_vmem [thread:$0]  %s3, 16, %s37, [#allocation7]
    $region17: #{tpu_custom_call.1} parent=1 // pred_fallthru
      _
    // Predicated region
    $region18: #{tpu_custom_call.1} parent=1 // pred_check
      _
    $region19: #{tpu_custom_call.1} parent=1 // pred_check_branch
      %41 = sbr.rel (0) target = $region21
    $region20: #{tpu_custom_call.1} parent=1 // pred_region
      _
    $region21: #{tpu_custom_call.1} parent=1 // pred_fallthru
      _
    // Predicated region
    $region22: #{tpu_custom_call.1} parent=1 // pred_check
      _
    $region23: #{tpu_custom_call.1} parent=1 // pred_check_branch
      %43 = sbr.rel (0) target = $region25
    $region24: #{tpu_custom_call.1} parent=1 // pred_region
      _
    $region25: #{tpu_custom_call.1} parent=1 // pred_fallthru
      _
    // Predicated region
    $region26: #{tpu_custom_call.1} parent=1 // pred_check
      _
    $region27: #{tpu_custom_call.1} parent=1 // pred_check_branch
      %45 = sbr.rel (0) target = $region29
    $region28: #{tpu_custom_call.1} parent=1 // pred_region
      _
    $region29: #{tpu_custom_call.1} parent=1 // pred_fallthru
      _
    // Predicated region
    $region30: #{tpu_custom_call.1} parent=1 // pred_check
      _
    $region31: #{tpu_custom_call.1} parent=1 // pred_check_branch
      %47 = sbr.rel (0) target = $region33
    $region32: #{tpu_custom_call.1} parent=1 // pred_region
      _
    $region33: #{tpu_custom_call.1} parent=1 // pred_fallthru
      _
    // Predicated region
    $region34: #{tpu_custom_call.1} parent=1 // pred_check
      _
    $region35: #{tpu_custom_call.1} parent=1 // pred_check_branch
      %49 = sbr.rel (0) target = $region37
    $region36: #{tpu_custom_call.1} parent=1 // pred_region
      %50 = dma.done [#allocation4], 128
    $region37: #{tpu_custom_call.1} parent=1 // pred_fallthru
      _
    // Predicated region
    $region38: #{tpu_custom_call.1} parent=1 // pred_check
      _
    $region39: #{tpu_custom_call.1} parent=1 // pred_check_branch
      %52 = sbr.rel (0) target = $region41
    $region40: #{tpu_custom_call.1} parent=1 // pred_region
      %53 = dma.done [#allocation7], 16
    $region41: #{tpu_custom_call.1} parent=1 // pred_fallthru
      _
    %p54 = scmp.eq.s32.totalorder 0, 0
    // Predicated region
    $region42: #{tpu_custom_call.1} parent=1 // pred_check
      %p55 = pneg %p54
    $region43: #{tpu_custom_call.1} parent=1 // pred_check_branch
      %57 = sbr.rel (%p55) target = $region45
    $region44: #{tpu_custom_call.1} parent=1 // pred_region
      %vm58 = vcmask 7168
      %59 = vst.msk [vmem:[#allocation2] sm:$0xff] %vm58, 0.0
    $region45: #{tpu_custom_call.1} parent=1 // pred_fallthru
      _
    %v60 = vld [vmem:[%s0] sm:$0xff]
    %v61 = vld [vmem:[%s0 + $0x8] sm:$0xff]
    %v62 = vld [vmem:[%s0 + $0x10] sm:$0xff]
    %v63 = vld [vmem:[%s0 + $0x18] sm:$0xff]
    %v64 = vmul.f32 %v60, %v60
    %v65 = vmul.f32 %v61, %v61
    %v66 = vmul.f32 %v62, %v62
    %v67 = vmul.f32 %v63, %v63
    %v68 = vadd.f32 %v64, %v65
    %69 = vadd.xlane.f32.xlu0 %v68
    %v70 = vpop.xlane.xlu0 %69
    %v71 = vadd.f32 %v66, %v67
    %72 = vadd.xlane.f32.xlu0 %v71
    %v73 = vpop.xlane.xlu0 %72
    %v74 = vld [vmem:[#allocation2] sm:$0xff]
    %v75 = vadd.f32 %v70, %v73
    %v76 = vadd.f32 %v74, %v75
    %vm77 = vcmask 7168
    %78 = vst.msk [vmem:[#allocation2] sm:$0xff] %vm77, %v76
    // Predicated region
    $region46: #{tpu_custom_call.1} parent=1 // pred_check
      %p79 = pneg %p54
    $region47: #{tpu_custom_call.1} parent=1 // pred_check_branch
      %81 = sbr.rel (%p79) target = $region49
    $region48: #{tpu_custom_call.1} parent=1 // pred_region
      %v82 = vld [vmem:[#allocation2] sm:$0xff]
      %v83 = vmul.f32 %v82, 0.001953125
      %v84 = vld [vmem:[%s1] sm:$0xff]
      %v85 = vadd.f32 %v83, %v84
      %v86 = vrsqrt.pop %v85
      %v87 = vmul.f32 %v85, %v86
      %vm88 = vcmp.eq.f32.partialorder %v85, inf
      %v89 = vsel %vm88, %v85, %v87
      %vm90 = vcmp.eq.f32.partialorder %v85, 0.0
      %v91 = vand.u32 %v85, 2147483648
      %v92 = vsel %vm90, %v91, %v89
      %v93 = vlaneseq
      %v94 = vshrl.u32 %v93, 7
      %v95 = vlaneseq
      %v96 = vand.u32 %v95, 127
      %vm97 = vcmp.eq.s32.totalorder %v94, %v96
      %v98 = vsel %vm97, 1, 0
      %v99 = vcvt.s32.f32 %v98
      %101 = vset.pattern.permute.xlu0 0
      %102 = vperm.xlu0 %101, %v92
      %v103 = vpop.permute.xlu0 %102
      %v105 = vmul.f32 %v103, %v99
      %vm106 = vcmask 64512
      %v107 = vsel %vm106, %v105, 0.0
      %v108 = vrot.slane %v107, 4
      %v109 = vadd.f32 %v107, %v108
      %v110 = vrot.slane %v109, 2
      %v111 = vadd.f32 %v109, %v110
      %v112 = vrot.slane %v111, 1
      %v113 = vadd.f32 %v111, %v112
      %v114 = vld [vmem:[#allocation3] sm:$0xff]
      %v115 = vld [vmem:[#allocation6] sm:$0x1]
      %v117 = vsel %vm106, %v113, 0
      %119 = vmatprep.subr.mxu0 0.0
      %120 = vmatpush1.msra.mxu0 %v114
      %121 = vmatprep.subr.mxu0 0.0
      %122 = vmatpush1.msra.mxu0 0.0
      %123 = vmatprep.subr.mxu0 0.0
      %124 = vmatpush1.msra.mxu0 0.0
      %125 = vmatprep.subr.mxu0 0.0
      %126 = vmatpush1.msra.mxu0 0.0
      %127 = vmatprep.subr.mxu0 0.0
      %128 = vmatpush1.msra.mxu0 0.0
      %129 = vmatprep.subr.mxu0 0.0
      %130 = vmatpush1.msra.mxu0 0.0
      %131 = vmatprep.subr.mxu0 0.0
      %132 = vmatpush1.msra.mxu0 0.0
      %133 = vmatprep.subr.mxu0 0.0
      %134 = vmatpush1.msra.mxu0 0.0
      %135 = vmatprep.subr.mxu0 0.0
      %136 = vmatpush1.msra.mxu0 0.0
      %137 = vmatprep.subr.mxu0 0.0
      %138 = vmatpush1.msra.mxu0 0.0
      %139 = vmatprep.subr.mxu0 0.0
      %140 = vmatpush1.msra.mxu0 0.0
      %141 = vmatprep.subr.mxu0 0.0
      %142 = vmatpush1.msra.mxu0 0.0
      %143 = vmatprep.subr.mxu0 0.0
      %144 = vmatpush1.msra.mxu0 0.0
      %145 = vmatprep.subr.mxu0 0.0
      %146 = vmatpush1.msra.mxu0 0.0
      %147 = vmatprep.subr.mxu0 0.0
      %148 = vmatpush1.msra.mxu0 0.0
      %149 = vmatprep.subr.mxu0 0.0
      %150 = vmatpush1.msra.mxu0 0.0
      %151 = vmatprep.subr.mxu0 0.0
      %152 = vmatpush1.msra.mxu0 0.0
      %153 = vmatprep.subr.mxu0 0.0
      %154 = vmatpush1.msra.mxu0 0.0
      %155 = vmatprep.subr.mxu0 0.0
      %156 = vmatpush1.msra.mxu0 0.0
      %157 = vmatprep.subr.mxu0 0.0
      %158 = vmatpush1.msra.mxu0 0.0
      %159 = vmatprep.subr.mxu0 0.0
      %160 = vmatpush1.msra.mxu0 0.0
      %161 = vmatprep.subr.mxu0 0.0
      %162 = vmatpush1.msra.mxu0 0.0
      %163 = vmatprep.subr.mxu0 0.0
      %164 = vmatpush1.msra.mxu0 0.0
      %165 = vmatprep.subr.mxu0 0.0
      %166 = vmatpush1.msra.mxu0 0.0
      %167 = vmatprep.subr.mxu0 0.0
      %168 = vmatpush1.msra.mxu0 0.0
      %169 = vmatprep.subr.mxu0 0.0
      %170 = vmatpush1.msra.mxu0 0.0
      %171 = vmatprep.subr.mxu0 0.0
      %172 = vmatpush1.msra.mxu0 0.0
      %173 = vmatprep.subr.mxu0 0.0
      %174 = vmatpush1.msra.mxu0 0.0
      %175 = vmatprep.subr.mxu0 0.0
      %176 = vmatpush1.msra.mxu0 0.0
      %177 = vmatprep.subr.mxu0 0.0
      %178 = vmatpush1.msra.mxu0 0.0
      %179 = vmatprep.subr.mxu0 0.0
      %180 = vmatpush1.msra.mxu0 0.0
      %181 = vmatprep.subr.mxu0 0.0
      %182 = vmatpush1.msra.mxu0 0.0
      %183 = vmatprep.mubr.f32.mxu0 0.0
      %184 = vmatmul.mubr.f32.gmra.mrb[0].mxu0 %v117
      %v185 = vpop.f32.mrb[0].mxu0
      %v186 = vadd.f32 %v115, %v185
      %v187 = vpop.f32.mrb[0].mxu0
      %188 = vdwg.mxu0
      %vm189 = vcmp.gt.f32.partialorder %v186, 0.0
      %v190 = vmul.f32 %v186, 0.01
      %v191 = vsel %vm189, %v186, %v190
      %v192 = vld [vmem:[%s4] sm:$0xff]
      %v193 = vld [vmem:[%s4 + $0x8] sm:$0xff]
      %v194 = vld [vmem:[%s4 + $0x10] sm:$0xff]
      %v195 = vld [vmem:[%s4 + $0x18] sm:$0xff]
      %v196 = vld [vmem:[%s4 + $0x20] sm:$0xff]
      %v197 = vld [vmem:[%s4 + $0x28] sm:$0xff]
      %v198 = vld [vmem:[%s4 + $0x30] sm:$0xff]
      %v199 = vld [vmem:[%s4 + $0x38] sm:$0xff]
      %v200 = vld [vmem:[%s5] sm:$0x1]
      %vm201 = vcmask 523264
      %v203 = vsel %vm201, %v191, 0
      %205 = vmatprep.subr.mxu0 0.0
      %206 = vmatpush1.msra.mxu0 %v192
      %207 = vmatprep.subr.mxu0 0.0
      %208 = vmatpush1.msra.mxu0 %v193
      %209 = vmatprep.subr.mxu0 0.0
      %210 = vmatpush1.msra.mxu0 %v194
      %211 = vmatprep.subr.mxu0 0.0
      %212 = vmatpush1.msra.mxu0 %v195
      %213 = vmatprep.subr.mxu0 0.0
      %214 = vmatpush1.msra.mxu0 %v196
      %215 = vmatprep.subr.mxu0 0.0
      %216 = vmatpush1.msra.mxu0 %v197
      %217 = vmatprep.subr.mxu0 0.0
      %218 = vmatpush1.msra.mxu0 %v198
      %219 = vmatprep.subr.mxu0 0.0
      %220 = vmatpush1.msra.mxu0 %v199
      %221 = vmatprep.subr.mxu0 0.0
      %222 = vmatpush1.msra.mxu0 0.0
      %223 = vmatprep.subr.mxu0 0.0
      %224 = vmatpush1.msra.mxu0 0.0
      %225 = vmatprep.subr.mxu0 0.0
      %226 = vmatpush1.msra.mxu0 0.0
      %227 = vmatprep.subr.mxu0 0.0
      %228 = vmatpush1.msra.mxu0 0.0
      %229 = vmatprep.subr.mxu0 0.0
      %230 = vmatpush1.msra.mxu0 0.0
      %231 = vmatprep.subr.mxu0 0.0
      %232 = vmatpush1.msra.mxu0 0.0
      %233 = vmatprep.subr.mxu0 0.0
      %234 = vmatpush1.msra.mxu0 0.0
      %235 = vmatprep.subr.mxu0 0.0
      %236 = vmatpush1.msra.mxu0 0.0
      %237 = vmatprep.subr.mxu0 0.0
      %238 = vmatpush1.msra.mxu0 0.0
      %239 = vmatprep.subr.mxu0 0.0
      %240 = vmatpush1.msra.mxu0 0.0
      %241 = vmatprep.subr.mxu0 0.0
      %242 = vmatpush1.msra.mxu0 0.0
      %243 = vmatprep.subr.mxu0 0.0
      %244 = vmatpush1.msra.mxu0 0.0
      %245 = vmatprep.subr.mxu0 0.0
      %246 = vmatpush1.msra.mxu0 0.0
      %247 = vmatprep.subr.mxu0 0.0
      %248 = vmatpush1.msra.mxu0 0.0
      %249 = vmatprep.subr.mxu0 0.0
      %250 = vmatpush1.msra.mxu0 0.0
      %251 = vmatprep.subr.mxu0 0.0
      %252 = vmatpush1.msra.mxu0 0.0
      %253 = vmatprep.subr.mxu0 0.0
      %254 = vmatpush1.msra.mxu0 0.0
      %255 = vmatprep.subr.mxu0 0.0
      %256 = vmatpush1.msra.mxu0 0.0
      %257 = vmatprep.subr.mxu0 0.0
      %258 = vmatpush1.msra.mxu0 0.0
      %259 = vmatprep.subr.mxu0 0.0
      %260 = vmatpush1.msra.mxu0 0.0
      %261 = vmatprep.subr.mxu0 0.0
      %262 = vmatpush1.msra.mxu0 0.0
      %263 = vmatprep.subr.mxu0 0.0
      %264 = vmatpush1.msra.mxu0 0.0
      %265 = vmatprep.subr.mxu0 0.0
      %266 = vmatpush1.msra.mxu0 0.0
      %267 = vmatprep.subr.mxu0 0.0
      %268 = vmatpush1.msra.mxu0 0.0
      %269 = vmatprep.mubr.f32.mxu0 0.0
      %270 = vmatmul.mubr.f32.gmra.mrb[0].mxu0 %v203
      %v271 = vpop.f32.mrb[0].mxu0
      %v272 = vadd.f32 %v200, %v271
      %v273 = vpop.f32.mrb[0].mxu0
      %274 = vdwg.mxu0
      %vm275 = vcmp.gt.f32.partialorder %v272, 0.0
      %v276 = vmul.f32 %v272, 0.01
      %v277 = vsel %vm275, %v272, %v276
      %v278 = vld [vmem:[%s6] sm:$0xff]
      %v279 = vld [vmem:[%s6 + $0x8] sm:$0xff]
      %v280 = vld [vmem:[%s6 + $0x10] sm:$0xff]
      %v281 = vld [vmem:[%s6 + $0x18] sm:$0xff]
      %v282 = vld [vmem:[%s6 + $0x20] sm:$0xff]
      %v283 = vld [vmem:[%s6 + $0x28] sm:$0xff]
      %v284 = vld [vmem:[%s6 + $0x30] sm:$0xff]
      %v285 = vld [vmem:[%s6 + $0x38] sm:$0xff]
      %v286 = vld [vmem:[%s7] sm:$0x1]
      %v288 = vsel %vm201, %v277, 0
      %290 = vmatprep.subr.mxu0 0.0
      %291 = vmatpush1.msra.mxu0 %v278
      %292 = vmatprep.subr.mxu0 0.0
      %293 = vmatpush1.msra.mxu0 %v279
      %294 = vmatprep.subr.mxu0 0.0
      %295 = vmatpush1.msra.mxu0 %v280
      %296 = vmatprep.subr.mxu0 0.0
      %297 = vmatpush1.msra.mxu0 %v281
      %298 = vmatprep.subr.mxu0 0.0
      %299 = vmatpush1.msra.mxu0 %v282
      %300 = vmatprep.subr.mxu0 0.0
      %301 = vmatpush1.msra.mxu0 %v283
      %302 = vmatprep.subr.mxu0 0.0
      %303 = vmatpush1.msra.mxu0 %v284
      %304 = vmatprep.subr.mxu0 0.0
      %305 = vmatpush1.msra.mxu0 %v285
      %306 = vmatprep.subr.mxu0 0.0
      %307 = vmatpush1.msra.mxu0 0.0
      %308 = vmatprep.subr.mxu0 0.0
      %309 = vmatpush1.msra.mxu0 0.0
      %310 = vmatprep.subr.mxu0 0.0
      %311 = vmatpush1.msra.mxu0 0.0
      %312 = vmatprep.subr.mxu0 0.0
      %313 = vmatpush1.msra.mxu0 0.0
      %314 = vmatprep.subr.mxu0 0.0
      %315 = vmatpush1.msra.mxu0 0.0
      %316 = vmatprep.subr.mxu0 0.0
      %317 = vmatpush1.msra.mxu0 0.0
      %318 = vmatprep.subr.mxu0 0.0
      %319 = vmatpush1.msra.mxu0 0.0
      %320 = vmatprep.subr.mxu0 0.0
      %321 = vmatpush1.msra.mxu0 0.0
      %322 = vmatprep.subr.mxu0 0.0
      %323 = vmatpush1.msra.mxu0 0.0
      %324 = vmatprep.subr.mxu0 0.0
      %325 = vmatpush1.msra.mxu0 0.0
      %326 = vmatprep.subr.mxu0 0.0
      %327 = vmatpush1.msra.mxu0 0.0
      %328 = vmatprep.subr.mxu0 0.0
      %329 = vmatpush1.msra.mxu0 0.0
      %330 = vmatprep.subr.mxu0 0.0
      %331 = vmatpush1.msra.mxu0 0.0
      %332 = vmatprep.subr.mxu0 0.0
      %333 = vmatpush1.msra.mxu0 0.0
      %334 = vmatprep.subr.mxu0 0.0
      %335 = vmatpush1.msra.mxu0 0.0
      %336 = vmatprep.subr.mxu0 0.0
      %337 = vmatpush1.msra.mxu0 0.0
      %338 = vmatprep.subr.mxu0 0.0
      %339 = vmatpush1.msra.mxu0 0.0
      %340 = vmatprep.subr.mxu0 0.0
      %341 = vmatpush1.msra.mxu0 0.0
      %342 = vmatprep.subr.mxu0 0.0
      %343 = vmatpush1.msra.mxu0 0.0
      %344 = vmatprep.subr.mxu0 0.0
      %345 = vmatpush1.msra.mxu0 0.0
      %346 = vmatprep.subr.mxu0 0.0
      %347 = vmatpush1.msra.mxu0 0.0
      %348 = vmatprep.subr.mxu0 0.0
      %349 = vmatpush1.msra.mxu0 0.0
      %350 = vmatprep.subr.mxu0 0.0
      %351 = vmatpush1.msra.mxu0 0.0
      %352 = vmatprep.subr.mxu0 0.0
      %353 = vmatpush1.msra.mxu0 0.0
      %354 = vmatprep.mubr.f32.mxu0 0.0
      %355 = vmatmul.mubr.f32.gmra.mrb[0].mxu0 %v288
      %v356 = vpop.f32.mrb[0].mxu0
      %v357 = vadd.f32 %v286, %v356
      %v358 = vpop.f32.mrb[0].mxu0
      %359 = vdwg.mxu0
      %v360 = vmul.f32 %v357, %v357
      %vm361 = vcmask 57344
      %362 = vst.msk [vmem:[#allocation8] sm:$0x1] %vm361, %v360
    $region49: #{tpu_custom_call.1} parent=1 // pred_fallthru
      _
    // Predicated region
    $region50: #{tpu_custom_call.1} parent=1 // pred_check
      _
    $region51: #{tpu_custom_call.1} parent=1 // pred_check_branch
      %364 = sbr.rel (0) target = $region53
    $region52: #{tpu_custom_call.1} parent=1 // pred_region
      %s366 = ssub.s32 16, 16
      %367 = vsyncadd [#allocation5], %s366
      %s369 = sshll.u32 [#allocation8], 4
      %s370 = int_to_ptr.vmem [resolvable:$true] %s369
      %372 = dma.vmem_to_hbm [thread:$0]  %s370, 16, %s8, [#allocation5]
    $region53: #{tpu_custom_call.1} parent=1 // pred_fallthru
      _
    // Predicated region
    $region54: #{tpu_custom_call.1} parent=1 // pred_check
      _
    $region55: #{tpu_custom_call.1} parent=1 // pred_check_branch
      %374 = sbr.rel (0) target = $region57
    $region56: #{tpu_custom_call.1} parent=1 // pred_region
      %375 = dma.done [#allocation5], 16
    $region57: #{tpu_custom_call.1} parent=1 // pred_fallthru
      _
    %376 = vsyncpa [#allocation4], 1
    %377 = vsyncpa [#allocation7], 1
    %378 = vsyncpa [#allocation5], 1

</llo_original>
